<compile_context>
chip_gen: v7x
topology: tpu7x:2x2x1
jax: 0.10.0
libtpu: 0.0.40
codegen_flags: <defaults>
</compile_context>

<pallas_src>
import functools

import jax
import jax.numpy as jnp
from jax import lax
from jax.experimental import pallas as pl
from jax.experimental.pallas import tpu as pltpu

_EPSILON = 1e-10
_LANE = 128
_ROW_TILE_CAP = 1024          # 1024 x 128 f32 = 512 KiB per buffer slot


def _append_ratio_kernel(x_hbm, o_hbm, a_buf, b_buf, r_buf, sem_abr, sem_pass,
                         *, c, idx_a, idx_b, row_tile, rows, n_tiles,
                         tiles_per_chunk):
    """x_hbm: (N, C, rows, 128) in HBM.  o_hbm: (N, C+1, rows, 128) in HBM.

    Grid step (i, cc) owns row tiles [cc*tpc, min((cc+1)*tpc, n_tiles)) of
    batch element i:
      1. prime the a/b tile pipeline, start the background pass-through copy,
      2. run a double-buffered load -> ratio -> store pipeline over its tiles,
      3. drain the in-flight ratio stores and the pass-through copy.
    """
    i = pl.program_id(0)                       # batch element
    cc = pl.program_id(1)                      # spatial chunk (v7x balance)

    t_lo = cc * tiles_per_chunk
    t_hi = jnp.minimum(t_lo + tiles_per_chunk, n_tiles)

    def row_start(t):
        # Clamped so the ragged last tile stays in bounds; the overlap with the
        # previous tile is recomputed and rewritten with identical data.
        return jnp.minimum(t * row_tile, rows - row_tile)

    def fetch(t, slot):
        r0 = row_start(t)
        return (
            pltpu.make_async_copy(
                x_hbm.at[i, idx_a, pl.ds(r0, row_tile), :],
                a_buf.at[slot], sem_abr.at[0, slot]),
            pltpu.make_async_copy(
                x_hbm.at[i, idx_b, pl.ds(r0, row_tile), :],
                b_buf.at[slot], sem_abr.at[1, slot]),
        )

    def store(t, slot):
        r0 = row_start(t)
        return pltpu.make_async_copy(
            r_buf.at[slot],
            o_hbm.at[i, c, pl.ds(r0, row_tile), :],
            sem_abr.at[2, slot])

    # --- 1. prime the tile pipeline, then start the bulk pass-through -------
    slot0 = t_lo & 1
    for cp in fetch(t_lo, slot0):
        cp.start()

    # Pass-through of the original C channels for this chunk's rows.  Started
    # now, waited only after the whole tile pipeline has been issued, so it
    # streams concurrently with the a/b loads, compute and ratio stores.
    # (Would ideally run at background DMA priority; not exposed here.)
    pass_rows = tiles_per_chunk * row_tile            # static, <= rows
    p0 = jnp.minimum(t_lo * row_tile, rows - pass_rows)
    cp_pass = pltpu.make_async_copy(
        x_hbm.at[i, pl.ds(0, c), pl.ds(p0, pass_rows), :],
        o_hbm.at[i, pl.ds(0, c), pl.ds(p0, pass_rows), :],
        sem_pass.at[0])
    cp_pass.start()

    # --- 2. double-buffered load -> ratio -> store pipeline -----------------
    def body(t, carry):
        slot = t & 1
        for cp in fetch(t, slot):                     # started at t-1 / prologue
            cp.wait()

        @pl.when(t + 1 < t_hi)                        # prefetch next tile's bands
        def _():
            for cp in fetch(t + 1, 1 - slot):
                cp.start()

        @pl.when(t - t_lo >= 2)                       # r_buf[slot] is reused:
        def _():                                      # drain its t-2 store first
            store(t, slot).wait()

        a = a_buf[slot].astype(jnp.float32)
        b = b_buf[slot].astype(jnp.float32)
        r_buf[slot] = (a / (b + jnp.float32(_EPSILON))).astype(r_buf.dtype)
        store(t, slot).start()
        return carry

    lax.fori_loop(t_lo, t_hi, body, 0)

    # --- 3. drain the (up to two) in-flight ratio stores, then pass-through -
    last = t_hi - 1
    store(last, last & 1).wait()

    @pl.when(t_hi - t_lo >= 2)
    def _():
        store(last - 1, (last - 1) & 1).wait()

    cp_pass.wait()


@functools.partial(jax.jit, static_argnums=(1, 2, 3))
def append_ratio_ab(x, index_a, index_b, row_tile_cap=_ROW_TILE_CAP):
    """x: (N, C, H, W) -> (N, C+1, H, W) with X[:,a]/(X[:,b]+eps) appended."""
    n, c, h, w = x.shape
    if not (-c <= index_a < c) or not (-c <= index_b < c):
        raise ValueError(f"band indices {index_a}, {index_b} out of range for C={c}")
    idx_a = index_a % c          # PyTorch negative-index semantics
    idx_b = index_b % c
    # TODO(synk): integer inputs would be truncated back to x.dtype here, unlike
    # PyTorch's float promotion; geospatial inputs are floating point in practice.

    hw = h * w
    hw_pad = _LANE * pl.cdiv(hw, _LANE)
    x_flat = x.reshape(n, c, hw)
    if hw_pad != hw:
        # Rare ragged case (H*W % 128 != 0): pad once in the wrapper so every
        # DMA stays lane-dense; the padded columns are sliced off below.
        x_flat = jnp.pad(x_flat, ((0, 0), (0, 0), (0, hw_pad - hw)))
    rows = hw_pad // _LANE
    x_r = x_flat.reshape(n, c, rows, _LANE)

    row_tile = min(rows, max(1, row_tile_cap))
    n_tiles = pl.cdiv(rows, row_tile)
    n_chunks = 2 if n_tiles >= 2 else 1        # v7x: one chunk per TensorCore
    tiles_per_chunk = pl.cdiv(n_tiles, n_chunks)

    kernel = functools.partial(
        _append_ratio_kernel, c=c, idx_a=idx_a, idx_b=idx_b,
        row_tile=row_tile, rows=rows, n_tiles=n_tiles,
        tiles_per_chunk=tiles_per_chunk)

    out = pl.pallas_call(
        kernel,
        out_shape=jax.ShapeDtypeStruct((n, c + 1, rows, _LANE), x.dtype),
        grid=(n, n_chunks),
        in_specs=[pl.BlockSpec(memory_space=pl.ANY)],     # raw HBM ref
        out_specs=pl.BlockSpec(memory_space=pl.ANY),      # raw HBM ref
        scratch_shapes=[
            pltpu.VMEM((2, row_tile, _LANE), x.dtype),    # band a (double-buffered)
            pltpu.VMEM((2, row_tile, _LANE), x.dtype),    # band b
            pltpu.VMEM((2, row_tile, _LANE), x.dtype),    # ratio
            pltpu.SemaphoreType.DMA((3, 2)),              # [a, b, r] x slot
            pltpu.SemaphoreType.DMA((1,)),                # pass-through copy
        ],
        compiler_params=pltpu.CompilerParams(
            dimension_semantics=("parallel", "parallel"),
        ),
    )(x_r)

    out = out.reshape(n, c + 1, hw_pad)
    if hw_pad != hw:
        out = out[..., :hw]
    return out.reshape(n, c + 1, h, w)


class AppendRatioAB:
    """JAX/Pallas equivalent of the PyTorch AppendRatioAB transform."""

    def __init__(self, index_a, index_b):
        self.dim = -3
        self.index_a = index_a
        self.index_b = index_b

    def __call__(self, sample):
        sample["image"] = append_ratio_ab(sample["image"], self.index_a, self.index_b)
        return sample


def _reference(x, ia, ib):
    ratio = x[:, ia, :, :] / (x[:, ib, :, :] + _EPSILON)
    return jnp.concatenate([x, ratio[:, None, :, :]], axis=1)


if __name__ == "__main__":
    k1, k2, k3 = jax.random.split(jax.random.PRNGKey(0), 3)

    # Primary case, consistent with the module: batch=2, channels=4, 16x16.
    x = jax.random.uniform(k1, (2, 4, 16, 16), dtype=jnp.float32) + 0.1
    out = AppendRatioAB(index_a=0, index_b=1)({"image": x})["image"]
    out = jax.block_until_ready(out)
    exp = _reference(x, 0, 1)
    assert out.shape == (2, 5, 16, 16), out.shape
    assert jnp.allclose(out, exp, rtol=1e-6, atol=1e-6), \
        float(jnp.max(jnp.abs(out - exp)))

    # Multi-tile / dual-chunk path: tiny row-tile cap exercises the
    # double-buffered pipeline, clamped ragged tiles and per-chunk pass-through.
    x2 = jax.random.uniform(k2, (2, 3, 16, 40), dtype=jnp.float32) + 0.1
    out2 = jax.block_until_ready(append_ratio_ab(x2, 1, 2, 1))
    assert jnp.allclose(out2, _reference(x2, 1, 2), rtol=1e-6, atol=1e-6)

    # Ragged H*W (not a multiple of 128) + negative denominator index.
    x3 = jax.random.uniform(k3, (1, 4, 7, 19), dtype=jnp.float32) + 0.1
    out3 = jax.block_until_ready(append_ratio_ab(x3, 2, -1))
    assert jnp.allclose(out3, _reference(x3, 2, -1), rtol=1e-6, atol=1e-6)

    print("KERNEL_OK")
</pallas_src>

<mosaic_0001>
module attributes {stable_mosaic.version = 11 : i64} {
  func.func @_append_ratio_kernel(%arg0: i32, %arg1: i32, %arg2: memref<2x4x2x128xf32, #tpu.memory_space<any>>, %arg3: memref<2x5x2x128xf32, #tpu.memory_space<any>>, %arg4: memref<2x2x128xf32, #tpu.memory_space<vmem>>, %arg5: memref<2x2x128xf32, #tpu.memory_space<vmem>>, %arg6: memref<2x2x128xf32, #tpu.memory_space<vmem>>, %arg7: memref<3x2x!tpu.dma_semaphore, #tpu.memory_space<semaphore_mem>>, %arg8: memref<1x!tpu.dma_semaphore, #tpu.memory_space<semaphore_mem>>) attributes {dimension_semantics = [#tpu.dimension_semantics<parallel>, #tpu.dimension_semantics<parallel>], iteration_bounds = array<i64: 2, 1>, scalar_prefetch = 0 : i64, scratch_operands = 5 : i64, tpu.core_type = #tpu.core_type<tc>, window_params = [{}, {}]} {
    %c1_i32 = arith.constant 1 : i32
    %0 = arith.muli %arg1, %c1_i32 : i32
    %c1_i32_0 = arith.constant 1 : i32
    %1 = arith.addi %0, %c1_i32_0 : i32
    %c1_i32_1 = arith.constant 1 : i32
    %2 = arith.minsi %1, %c1_i32_1 : i32
    %c1_i32_2 = arith.constant 1 : i32
    %3 = arith.andi %0, %c1_i32_2 : i32
    %c2_i32 = arith.constant 2 : i32
    %4 = arith.muli %0, %c2_i32 : i32
    %c0_i32 = arith.constant 0 : i32
    %5 = arith.minsi %4, %c0_i32 : i32
    %c0_i32_3 = arith.constant 0 : i32
    %c0_i32_4 = arith.constant 0 : i32
    %c0_i32_5 = arith.constant 0 : i32
    %6 = tpu.memref_slice %arg2[%arg0, %c0_i32_3, %5, %c0_i32_5] : memref<2x4x2x128xf32, #tpu.memory_space<any>> -> memref<1x1x2x128xf32, #tpu.memory_space<any>>
    %7 = tpu.memref_squeeze %6 : memref<1x1x2x128xf32, #tpu.memory_space<any>> -> memref<2x128xf32, #tpu.memory_space<any>>
    %c0_i32_6 = arith.constant 0 : i32
    %c0_i32_7 = arith.constant 0 : i32
    %8 = tpu.memref_slice %arg4[%3, %c0_i32_6, %c0_i32_7] : memref<2x2x128xf32, #tpu.memory_space<vmem>> -> memref<1x2x128xf32, #tpu.memory_space<vmem>>
    %9 = tpu.memref_squeeze %8 : memref<1x2x128xf32, #tpu.memory_space<vmem>> -> memref<2x128xf32, #tpu.memory_space<vmem>>
    %10 = tpu.memref_slice %arg7[%c0_i32_4, %3] : memref<3x2x!tpu.dma_semaphore, #tpu.memory_space<semaphore_mem>> -> memref<1x1x!tpu.dma_semaphore, #tpu.memory_space<semaphore_mem>>
    %11 = tpu.memref_squeeze %10 : memref<1x1x!tpu.dma_semaphore, #tpu.memory_space<semaphore_mem>> -> memref<!tpu.dma_semaphore, #tpu.memory_space<semaphore_mem>>
    tpu.enqueue_dma source(%7 : memref<2x128xf32, #tpu.memory_space<any>>) target(%9 : memref<2x128xf32, #tpu.memory_space<vmem>>) target_semaphore(%11 : memref<!tpu.dma_semaphore, #tpu.memory_space<semaphore_mem>>)
    %c1_i32_8 = arith.constant 1 : i32
    %c1_i32_9 = arith.constant 1 : i32
    %c0_i32_10 = arith.constant 0 : i32
    %12 = tpu.memref_slice %arg2[%arg0, %c1_i32_8, %5, %c0_i32_10] : memref<2x4x2x128xf32, #tpu.memory_space<any>> -> memref<1x1x2x128xf32, #tpu.memory_space<any>>
    %13 = tpu.memref_squeeze %12 : memref<1x1x2x128xf32, #tpu.memory_space<any>> -> memref<2x128xf32, #tpu.memory_space<any>>
    %c0_i32_11 = arith.constant 0 : i32
    %c0_i32_12 = arith.constant 0 : i32
    %14 = tpu.memref_slice %arg5[%3, %c0_i32_11, %c0_i32_12] : memref<2x2x128xf32, #tpu.memory_space<vmem>> -> memref<1x2x128xf32, #tpu.memory_space<vmem>>
    %15 = tpu.memref_squeeze %14 : memref<1x2x128xf32, #tpu.memory_space<vmem>> -> memref<2x128xf32, #tpu.memory_space<vmem>>
    %16 = tpu.memref_slice %arg7[%c1_i32_9, %3] : memref<3x2x!tpu.dma_semaphore, #tpu.memory_space<semaphore_mem>> -> memref<1x1x!tpu.dma_semaphore, #tpu.memory_space<semaphore_mem>>
    %17 = tpu.memref_squeeze %16 : memref<1x1x!tpu.dma_semaphore, #tpu.memory_space<semaphore_mem>> -> memref<!tpu.dma_semaphore, #tpu.memory_space<semaphore_mem>>
    tpu.enqueue_dma source(%13 : memref<2x128xf32, #tpu.memory_space<any>>) target(%15 : memref<2x128xf32, #tpu.memory_space<vmem>>) target_semaphore(%17 : memref<!tpu.dma_semaphore, #tpu.memory_space<semaphore_mem>>)
    %c2_i32_13 = arith.constant 2 : i32
    %18 = arith.muli %0, %c2_i32_13 : i32
    %c0_i32_14 = arith.constant 0 : i32
    %19 = arith.minsi %18, %c0_i32_14 : i32
    %c0_i32_15 = arith.constant 0 : i32
    %c0_i32_16 = arith.constant 0 : i32
    %c0_i32_17 = arith.constant 0 : i32
    %20 = tpu.memref_slice %arg2[%arg0, %c0_i32_16, %19, %c0_i32_17] : memref<2x4x2x128xf32, #tpu.memory_space<any>> -> memref<1x4x2x128xf32, #tpu.memory_space<any>>
    %21 = tpu.memref_squeeze %20 : memref<1x4x2x128xf32, #tpu.memory_space<any>> -> memref<4x2x128xf32, #tpu.memory_space<any>>
    %c0_i32_18 = arith.constant 0 : i32
    %c0_i32_19 = arith.constant 0 : i32
    %22 = tpu.memref_slice %arg3[%arg0, %c0_i32_18, %19, %c0_i32_19] : memref<2x5x2x128xf32, #tpu.memory_space<any>> -> memref<1x4x2x128xf32, #tpu.memory_space<any>>
    %23 = tpu.memref_squeeze %22 : memref<1x4x2x128xf32, #tpu.memory_space<any>> -> memref<4x2x128xf32, #tpu.memory_space<any>>
    %24 = tpu.memref_slice %arg8[%c0_i32_15] : memref<1x!tpu.dma_semaphore, #tpu.memory_space<semaphore_mem>> -> memref<1x!tpu.dma_semaphore, #tpu.memory_space<semaphore_mem>>
    %25 = tpu.memref_squeeze %24 : memref<1x!tpu.dma_semaphore, #tpu.memory_space<semaphore_mem>> -> memref<!tpu.dma_semaphore, #tpu.memory_space<semaphore_mem>>
    tpu.enqueue_dma source(%21 : memref<4x2x128xf32, #tpu.memory_space<any>>) target(%23 : memref<4x2x128xf32, #tpu.memory_space<any>>) target_semaphore(%25 : memref<!tpu.dma_semaphore, #tpu.memory_space<semaphore_mem>>)
    %c0_i32_20 = arith.constant 0 : i32
    %26 = arith.subi %2, %0 : i32
    %27 = arith.addi %0, %26 : i32
    %c1_i32_21 = arith.constant 1 : i32
    scf.for %arg9 = %0 to %27 step %c1_i32_21  : i32 {
      %c1_i32_37 = arith.constant 1 : i32
      %48 = arith.andi %arg9, %c1_i32_37 : i32
      %c2_i32_38 = arith.constant 2 : i32
      %49 = arith.muli %arg9, %c2_i32_38 : i32
      %c0_i32_39 = arith.constant 0 : i32
      %50 = arith.minsi %49, %c0_i32_39 : i32
      %c0_i32_40 = arith.constant 0 : i32
      %c0_i32_41 = arith.constant 0 : i32
      %c0_i32_42 = arith.constant 0 : i32
      %51 = tpu.memref_slice %arg2[%arg0, %c0_i32_40, %50, %c0_i32_42] : memref<2x4x2x128xf32, #tpu.memory_space<any>> -> memref<1x1x2x128xf32, #tpu.memory_space<any>>
      %52 = tpu.memref_squeeze %51 : memref<1x1x2x128xf32, #tpu.memory_space<any>> -> memref<2x128xf32, #tpu.memory_space<any>>
      %c0_i32_43 = arith.constant 0 : i32
      %c0_i32_44 = arith.constant 0 : i32
      %53 = tpu.memref_slice %arg4[%48, %c0_i32_43, %c0_i32_44] : memref<2x2x128xf32, #tpu.memory_space<vmem>> -> memref<1x2x128xf32, #tpu.memory_space<vmem>>
      %54 = tpu.memref_squeeze %53 : memref<1x2x128xf32, #tpu.memory_space<vmem>> -> memref<2x128xf32, #tpu.memory_space<vmem>>
      %55 = tpu.memref_slice %arg7[%c0_i32_41, %48] : memref<3x2x!tpu.dma_semaphore, #tpu.memory_space<semaphore_mem>> -> memref<1x1x!tpu.dma_semaphore, #tpu.memory_space<semaphore_mem>>
      %56 = tpu.memref_squeeze %55 : memref<1x1x!tpu.dma_semaphore, #tpu.memory_space<semaphore_mem>> -> memref<!tpu.dma_semaphore, #tpu.memory_space<semaphore_mem>>
      tpu.wait_dma2 semaphore(%56 : memref<!tpu.dma_semaphore, #tpu.memory_space<semaphore_mem>>) src(%52 : memref<2x128xf32, #tpu.memory_space<any>>) dst(%54 : memref<2x128xf32, #tpu.memory_space<vmem>>)
      %c1_i32_45 = arith.constant 1 : i32
      %c1_i32_46 = arith.constant 1 : i32
      %c0_i32_47 = arith.constant 0 : i32
      %57 = tpu.memref_slice %arg2[%arg0, %c1_i32_45, %50, %c0_i32_47] : memref<2x4x2x128xf32, #tpu.memory_space<any>> -> memref<1x1x2x128xf32, #tpu.memory_space<any>>
      %58 = tpu.memref_squeeze %57 : memref<1x1x2x128xf32, #tpu.memory_space<any>> -> memref<2x128xf32, #tpu.memory_space<any>>
      %c0_i32_48 = arith.constant 0 : i32
      %c0_i32_49 = arith.constant 0 : i32
      %59 = tpu.memref_slice %arg5[%48, %c0_i32_48, %c0_i32_49] : memref<2x2x128xf32, #tpu.memory_space<vmem>> -> memref<1x2x128xf32, #tpu.memory_space<vmem>>
      %60 = tpu.memref_squeeze %59 : memref<1x2x128xf32, #tpu.memory_space<vmem>> -> memref<2x128xf32, #tpu.memory_space<vmem>>
      %61 = tpu.memref_slice %arg7[%c1_i32_46, %48] : memref<3x2x!tpu.dma_semaphore, #tpu.memory_space<semaphore_mem>> -> memref<1x1x!tpu.dma_semaphore, #tpu.memory_space<semaphore_mem>>
      %62 = tpu.memref_squeeze %61 : memref<1x1x!tpu.dma_semaphore, #tpu.memory_space<semaphore_mem>> -> memref<!tpu.dma_semaphore, #tpu.memory_space<semaphore_mem>>
      tpu.wait_dma2 semaphore(%62 : memref<!tpu.dma_semaphore, #tpu.memory_space<semaphore_mem>>) src(%58 : memref<2x128xf32, #tpu.memory_space<any>>) dst(%60 : memref<2x128xf32, #tpu.memory_space<vmem>>)
      %c1_i32_50 = arith.constant 1 : i32
      %63 = arith.addi %arg9, %c1_i32_50 : i32
      %64 = arith.cmpi slt, %63, %2 : i32
      %65 = arith.extui %64 : i1 to i32
      %c0_i32_51 = arith.constant 0 : i32
      %66 = arith.cmpi ne, %65, %c0_i32_51 : i32
      scf.if %66 {
        %c1_i32_66 = arith.constant 1 : i32
        %92 = arith.addi %arg9, %c1_i32_66 : i32
        %c1_i32_67 = arith.constant 1 : i32
        %93 = arith.subi %c1_i32_67, %48 : i32
        %c2_i32_68 = arith.constant 2 : i32
        %94 = arith.muli %92, %c2_i32_68 : i32
        %c0_i32_69 = arith.constant 0 : i32
        %95 = arith.minsi %94, %c0_i32_69 : i32
        %c0_i32_70 = arith.constant 0 : i32
        %c0_i32_71 = arith.constant 0 : i32
        %c0_i32_72 = arith.constant 0 : i32
        %96 = tpu.memref_slice %arg2[%arg0, %c0_i32_70, %95, %c0_i32_72] : memref<2x4x2x128xf32, #tpu.memory_space<any>> -> memref<1x1x2x128xf32, #tpu.memory_space<any>>
        %97 = tpu.memref_squeeze %96 : memref<1x1x2x128xf32, #tpu.memory_space<any>> -> memref<2x128xf32, #tpu.memory_space<any>>
        %c0_i32_73 = arith.constant 0 : i32
        %c0_i32_74 = arith.constant 0 : i32
        %98 = tpu.memref_slice %arg4[%93, %c0_i32_73, %c0_i32_74] : memref<2x2x128xf32, #tpu.memory_space<vmem>> -> memref<1x2x128xf32, #tpu.memory_space<vmem>>
        %99 = tpu.memref_squeeze %98 : memref<1x2x128xf32, #tpu.memory_space<vmem>> -> memref<2x128xf32, #tpu.memory_space<vmem>>
        %100 = tpu.memref_slice %arg7[%c0_i32_71, %93] : memref<3x2x!tpu.dma_semaphore, #tpu.memory_space<semaphore_mem>> -> memref<1x1x!tpu.dma_semaphore, #tpu.memory_space<semaphore_mem>>
        %101 = tpu.memref_squeeze %100 : memref<1x1x!tpu.dma_semaphore, #tpu.memory_space<semaphore_mem>> -> memref<!tpu.dma_semaphore, #tpu.memory_space<semaphore_mem>>
        tpu.enqueue_dma source(%97 : memref<2x128xf32, #tpu.memory_space<any>>) target(%99 : memref<2x128xf32, #tpu.memory_space<vmem>>) target_semaphore(%101 : memref<!tpu.dma_semaphore, #tpu.memory_space<semaphore_mem>>)
        %c1_i32_75 = arith.constant 1 : i32
        %c1_i32_76 = arith.constant 1 : i32
        %c0_i32_77 = arith.constant 0 : i32
        %102 = tpu.memref_slice %arg2[%arg0, %c1_i32_75, %95, %c0_i32_77] : memref<2x4x2x128xf32, #tpu.memory_space<any>> -> memref<1x1x2x128xf32, #tpu.memory_space<any>>
        %103 = tpu.memref_squeeze %102 : memref<1x1x2x128xf32, #tpu.memory_space<any>> -> memref<2x128xf32, #tpu.memory_space<any>>
        %c0_i32_78 = arith.constant 0 : i32
        %c0_i32_79 = arith.constant 0 : i32
        %104 = tpu.memref_slice %arg5[%93, %c0_i32_78, %c0_i32_79] : memref<2x2x128xf32, #tpu.memory_space<vmem>> -> memref<1x2x128xf32, #tpu.memory_space<vmem>>
        %105 = tpu.memref_squeeze %104 : memref<1x2x128xf32, #tpu.memory_space<vmem>> -> memref<2x128xf32, #tpu.memory_space<vmem>>
        %106 = tpu.memref_slice %arg7[%c1_i32_76, %93] : memref<3x2x!tpu.dma_semaphore, #tpu.memory_space<semaphore_mem>> -> memref<1x1x!tpu.dma_semaphore, #tpu.memory_space<semaphore_mem>>
        %107 = tpu.memref_squeeze %106 : memref<1x1x!tpu.dma_semaphore, #tpu.memory_space<semaphore_mem>> -> memref<!tpu.dma_semaphore, #tpu.memory_space<semaphore_mem>>
        tpu.enqueue_dma source(%103 : memref<2x128xf32, #tpu.memory_space<any>>) target(%105 : memref<2x128xf32, #tpu.memory_space<vmem>>) target_semaphore(%107 : memref<!tpu.dma_semaphore, #tpu.memory_space<semaphore_mem>>)
      } else {
      }
      %67 = arith.subi %arg9, %0 : i32
      %c2_i32_52 = arith.constant 2 : i32
      %68 = arith.cmpi sge, %67, %c2_i32_52 : i32
      %69 = arith.extui %68 : i1 to i32
      %c0_i32_53 = arith.constant 0 : i32
      %70 = arith.cmpi ne, %69, %c0_i32_53 : i32
      scf.if %70 {
        %c2_i32_66 = arith.constant 2 : i32
        %92 = arith.muli %arg9, %c2_i32_66 : i32
        %c0_i32_67 = arith.constant 0 : i32
        %93 = arith.minsi %92, %c0_i32_67 : i32
        %c4_i32_68 = arith.constant 4 : i32
        %c2_i32_69 = arith.constant 2 : i32
        %c0_i32_70 = arith.constant 0 : i32
        %c0_i32_71 = arith.constant 0 : i32
        %94 = tpu.memref_slice %arg6[%48, %c0_i32_70, %c0_i32_71] : memref<2x2x128xf32, #tpu.memory_space<vmem>> -> memref<1x2x128xf32, #tpu.memory_space<vmem>>
        %95 = tpu.memref_squeeze %94 : memref<1x2x128xf32, #tpu.memory_space<vmem>> -> memref<2x128xf32, #tpu.memory_space<vmem>>
        %c0_i32_72 = arith.constant 0 : i32
        %96 = tpu.memref_slice %arg3[%arg0, %c4_i32_68, %93, %c0_i32_72] : memref<2x5x2x128xf32, #tpu.memory_space<any>> -> memref<1x1x2x128xf32, #tpu.memory_space<any>>
        %97 = tpu.memref_squeeze %96 : memref<1x1x2x128xf32, #tpu.memory_space<any>> -> memref<2x128xf32, #tpu.memory_space<any>>
        %98 = tpu.memref_slice %arg7[%c2_i32_69, %48] : memref<3x2x!tpu.dma_semaphore, #tpu.memory_space<semaphore_mem>> -> memref<1x1x!tpu.dma_semaphore, #tpu.memory_space<semaphore_mem>>
        %99 = tpu.memref_squeeze %98 : memref<1x1x!tpu.dma_semaphore, #tpu.memory_space<semaphore_mem>> -> memref<!tpu.dma_semaphore, #tpu.memory_space<semaphore_mem>>
        tpu.wait_dma2 semaphore(%99 : memref<!tpu.dma_semaphore, #tpu.memory_space<semaphore_mem>>) src(%95 : memref<2x128xf32, #tpu.memory_space<vmem>>) dst(%97 : memref<2x128xf32, #tpu.memory_space<any>>)
      } else {
      }
      %71 = arith.index_cast %48 : i32 to index
      %c0 = arith.constant 0 : index
      %c0_54 = arith.constant 0 : index
      %72 = vector.load %arg4[%71, %c0, %c0_54] : memref<2x2x128xf32, #tpu.memory_space<vmem>>, vector<1x2x128xf32>
      %73 = vector.shape_cast %72 : vector<1x2x128xf32> to vector<2x128xf32>
      %74 = arith.index_cast %48 : i32 to index
      %c0_55 = arith.constant 0 : index
      %c0_56 = arith.constant 0 : index
      %75 = vector.load %arg5[%74, %c0_55, %c0_56] : memref<2x2x128xf32, #tpu.memory_space<vmem>>, vector<1x2x128xf32>
      %76 = vector.shape_cast %75 : vector<1x2x128xf32> to vector<2x128xf32>
      %cst = arith.constant 1.000000e-10 : f32
      %77 = vector.broadcast %cst : f32 to vector<2x128xf32>
      %78 = arith.addf %76, %77 : vector<2x128xf32>
      %79 = arith.divf %73, %78 : vector<2x128xf32>
      %80 = arith.index_cast %48 : i32 to index
      %c0_57 = arith.constant 0 : index
      %c0_58 = arith.constant 0 : index
      %81 = vector.load %arg6[%80, %c0_57, %c0_58] : memref<2x2x128xf32, #tpu.memory_space<vmem>>, vector<1x2x128xf32>
      %82 = vector.shape_cast %81 : vector<1x2x128xf32> to vector<2x128xf32>
      %83 = vector.shape_cast %79 : vector<2x128xf32> to vector<1x2x128xf32>
      tpu.vector_store %arg6[%80, %c0_57, %c0_58], %83 {strides = array<i32>} : memref<2x2x128xf32, #tpu.memory_space<vmem>>, vector<1x2x128xf32>,
      %c2_i32_59 = arith.constant 2 : i32
      %84 = arith.muli %arg9, %c2_i32_59 : i32
      %c0_i32_60 = arith.constant 0 : i32
      %85 = arith.minsi %84, %c0_i32_60 : i32
      %c4_i32_61 = arith.constant 4 : i32
      %c2_i32_62 = arith.constant 2 : i32
      %c0_i32_63 = arith.constant 0 : i32
      %c0_i32_64 = arith.constant 0 : i32
      %86 = tpu.memref_slice %arg6[%48, %c0_i32_63, %c0_i32_64] : memref<2x2x128xf32, #tpu.memory_space<vmem>> -> memref<1x2x128xf32, #tpu.memory_space<vmem>>
      %87 = tpu.memref_squeeze %86 : memref<1x2x128xf32, #tpu.memory_space<vmem>> -> memref<2x128xf32, #tpu.memory_space<vmem>>
      %c0_i32_65 = arith.constant 0 : i32
      %88 = tpu.memref_slice %arg3[%arg0, %c4_i32_61, %85, %c0_i32_65] : memref<2x5x2x128xf32, #tpu.memory_space<any>> -> memref<1x1x2x128xf32, #tpu.memory_space<any>>
      %89 = tpu.memref_squeeze %88 : memref<1x1x2x128xf32, #tpu.memory_space<any>> -> memref<2x128xf32, #tpu.memory_space<any>>
      %90 = tpu.memref_slice %arg7[%c2_i32_62, %48] : memref<3x2x!tpu.dma_semaphore, #tpu.memory_space<semaphore_mem>> -> memref<1x1x!tpu.dma_semaphore, #tpu.memory_space<semaphore_mem>>
      %91 = tpu.memref_squeeze %90 : memref<1x1x!tpu.dma_semaphore, #tpu.memory_space<semaphore_mem>> -> memref<!tpu.dma_semaphore, #tpu.memory_space<semaphore_mem>>
      tpu.enqueue_dma source(%87 : memref<2x128xf32, #tpu.memory_space<vmem>>) target(%89 : memref<2x128xf32, #tpu.memory_space<any>>) target_semaphore(%91 : memref<!tpu.dma_semaphore, #tpu.memory_space<semaphore_mem>>)
    }
    %c1_i32_22 = arith.constant 1 : i32
    %28 = arith.subi %2, %c1_i32_22 : i32
    %c1_i32_23 = arith.constant 1 : i32
    %29 = arith.andi %28, %c1_i32_23 : i32
    %c2_i32_24 = arith.constant 2 : i32
    %30 = arith.muli %28, %c2_i32_24 : i32
    %c0_i32_25 = arith.constant 0 : i32
    %31 = arith.minsi %30, %c0_i32_25 : i32
    %c4_i32 = arith.constant 4 : i32
    %c2_i32_26 = arith.constant 2 : i32
    %c0_i32_27 = arith.constant 0 : i32
    %c0_i32_28 = arith.constant 0 : i32
    %32 = tpu.memref_slice %arg6[%29, %c0_i32_27, %c0_i32_28] : memref<2x2x128xf32, #tpu.memory_space<vmem>> -> memref<1x2x128xf32, #tpu.memory_space<vmem>>
    %33 = tpu.memref_squeeze %32 : memref<1x2x128xf32, #tpu.memory_space<vmem>> -> memref<2x128xf32, #tpu.memory_space<vmem>>
    %c0_i32_29 = arith.constant 0 : i32
    %34 = tpu.memref_slice %arg3[%arg0, %c4_i32, %31, %c0_i32_29] : memref<2x5x2x128xf32, #tpu.memory_space<any>> -> memref<1x1x2x128xf32, #tpu.memory_space<any>>
    %35 = tpu.memref_squeeze %34 : memref<1x1x2x128xf32, #tpu.memory_space<any>> -> memref<2x128xf32, #tpu.memory_space<any>>
    %36 = tpu.memref_slice %arg7[%c2_i32_26, %29] : memref<3x2x!tpu.dma_semaphore, #tpu.memory_space<semaphore_mem>> -> memref<1x1x!tpu.dma_semaphore, #tpu.memory_space<semaphore_mem>>
    %37 = tpu.memref_squeeze %36 : memref<1x1x!tpu.dma_semaphore, #tpu.memory_space<semaphore_mem>> -> memref<!tpu.dma_semaphore, #tpu.memory_space<semaphore_mem>>
    tpu.wait_dma2 semaphore(%37 : memref<!tpu.dma_semaphore, #tpu.memory_space<semaphore_mem>>) src(%33 : memref<2x128xf32, #tpu.memory_space<vmem>>) dst(%35 : memref<2x128xf32, #tpu.memory_space<any>>)
    %38 = arith.subi %2, %0 : i32
    %c2_i32_30 = arith.constant 2 : i32
    %39 = arith.cmpi sge, %38, %c2_i32_30 : i32
    %40 = arith.extui %39 : i1 to i32
    %c0_i32_31 = arith.constant 0 : i32
    %41 = arith.cmpi ne, %40, %c0_i32_31 : i32
    scf.if %41 {
      %c1_i32_37 = arith.constant 1 : i32
      %48 = arith.subi %28, %c1_i32_37 : i32
      %c1_i32_38 = arith.constant 1 : i32
      %49 = arith.subi %28, %c1_i32_38 : i32
      %c1_i32_39 = arith.constant 1 : i32
      %50 = arith.andi %49, %c1_i32_39 : i32
      %c2_i32_40 = arith.constant 2 : i32
      %51 = arith.muli %48, %c2_i32_40 : i32
      %c0_i32_41 = arith.constant 0 : i32
      %52 = arith.minsi %51, %c0_i32_41 : i32
      %c4_i32_42 = arith.constant 4 : i32
      %c2_i32_43 = arith.constant 2 : i32
      %c0_i32_44 = arith.constant 0 : i32
      %c0_i32_45 = arith.constant 0 : i32
      %53 = tpu.memref_slice %arg6[%50, %c0_i32_44, %c0_i32_45] : memref<2x2x128xf32, #tpu.memory_space<vmem>> -> memref<1x2x128xf32, #tpu.memory_space<vmem>>
      %54 = tpu.memref_squeeze %53 : memref<1x2x128xf32, #tpu.memory_space<vmem>> -> memref<2x128xf32, #tpu.memory_space<vmem>>
      %c0_i32_46 = arith.constant 0 : i32
      %55 = tpu.memref_slice %arg3[%arg0, %c4_i32_42, %52, %c0_i32_46] : memref<2x5x2x128xf32, #tpu.memory_space<any>> -> memref<1x1x2x128xf32, #tpu.memory_space<any>>
      %56 = tpu.memref_squeeze %55 : memref<1x1x2x128xf32, #tpu.memory_space<any>> -> memref<2x128xf32, #tpu.memory_space<any>>
      %57 = tpu.memref_slice %arg7[%c2_i32_43, %50] : memref<3x2x!tpu.dma_semaphore, #tpu.memory_space<semaphore_mem>> -> memref<1x1x!tpu.dma_semaphore, #tpu.memory_space<semaphore_mem>>
      %58 = tpu.memref_squeeze %57 : memref<1x1x!tpu.dma_semaphore, #tpu.memory_space<semaphore_mem>> -> memref<!tpu.dma_semaphore, #tpu.memory_space<semaphore_mem>>
      tpu.wait_dma2 semaphore(%58 : memref<!tpu.dma_semaphore, #tpu.memory_space<semaphore_mem>>) src(%54 : memref<2x128xf32, #tpu.memory_space<vmem>>) dst(%56 : memref<2x128xf32, #tpu.memory_space<any>>)
    } else {
    }
    %c0_i32_32 = arith.constant 0 : i32
    %c0_i32_33 = arith.constant 0 : i32
    %c0_i32_34 = arith.constant 0 : i32
    %42 = tpu.memref_slice %arg2[%arg0, %c0_i32_33, %19, %c0_i32_34] : memref<2x4x2x128xf32, #tpu.memory_space<any>> -> memref<1x4x2x128xf32, #tpu.memory_space<any>>
    %43 = tpu.memref_squeeze %42 : memref<1x4x2x128xf32, #tpu.memory_space<any>> -> memref<4x2x128xf32, #tpu.memory_space<any>>
    %c0_i32_35 = arith.constant 0 : i32
    %c0_i32_36 = arith.constant 0 : i32
    %44 = tpu.memref_slice %arg3[%arg0, %c0_i32_35, %19, %c0_i32_36] : memref<2x5x2x128xf32, #tpu.memory_space<any>> -> memref<1x4x2x128xf32, #tpu.memory_space<any>>
    %45 = tpu.memref_squeeze %44 : memref<1x4x2x128xf32, #tpu.memory_space<any>> -> memref<4x2x128xf32, #tpu.memory_space<any>>
    %46 = tpu.memref_slice %arg8[%c0_i32_32] : memref<1x!tpu.dma_semaphore, #tpu.memory_space<semaphore_mem>> -> memref<1x!tpu.dma_semaphore, #tpu.memory_space<semaphore_mem>>
    %47 = tpu.memref_squeeze %46 : memref<1x!tpu.dma_semaphore, #tpu.memory_space<semaphore_mem>> -> memref<!tpu.dma_semaphore, #tpu.memory_space<semaphore_mem>>
    tpu.wait_dma2 semaphore(%47 : memref<!tpu.dma_semaphore, #tpu.memory_space<semaphore_mem>>) src(%43 : memref<4x2x128xf32, #tpu.memory_space<any>>) dst(%45 : memref<4x2x128xf32, #tpu.memory_space<any>>)
    return
  }
}

</mosaic_0001>

<llo_original>
// kernel: append_ratio_ab.1
$region0: #{append_ratio_ab.1}
  #allocation0 [shape = 'u32[]', space=smem, size = 0x4, offset = 0x4, fixed_abs, tag = 'smem constant byte address 0x4 - core index']
  #allocation1 [shape = 'u32[144,128]{1,0:T(1,128)}', space=vmem, size = 0x12000, scoped, tag = 'internal scratch']
  #allocation2 [shape = 'f32[2,2,128]{2,1,0:T(2,128)}', space=vmem, size = 0x800, scoped, tag = 'scratch operand']
  #allocation3 [shape = 'f32[2,2,128]{2,1,0:T(2,128)}', space=vmem, size = 0x800, scoped, tag = 'scratch operand']
  #allocation4 [shape = 'f32[2,2,128]{2,1,0:T(2,128)}', space=vmem, size = 0x800, scoped, tag = 'scratch operand']
  #allocation5 [shape = 's32[6]{0}', space=sflag, size = 0x18, scoped, tag = 'scratch operand']
  #allocation6 [shape = 's32[1]{0}', space=sflag, size = 0x4, scoped, tag = 'scratch operand']
  #allocation7 [shape = 's32[]', space=sflag, size = 0x4, offset = 0, fixed_abs, tag = 'sflag constant byte address 0x0 - dummy sync flag']
  #allocation8 [shape = 's32[]', space=sflag, size = 0x4, offset = 0, fixed_abs, tag = 'sflag constant byte address 0x0 - dummy sync flag']
  #allocation9 [shape = 's32[]', space=sflag, size = 0x4, offset = 0, fixed_abs, tag = 'sflag constant byte address 0x0 - dummy sync flag']
  #allocation10 [shape = 's32[]', space=sflag, size = 0x4, offset = 0, fixed_abs, tag = 'sflag constant byte address 0x0 - dummy sync flag']
  #allocation11 [shape = 's32[]', space=sflag, size = 0x4, offset = 0, fixed_abs, tag = 'sflag constant byte address 0x0 - dummy sync flag']
  #allocation12 [shape = 's32[]', space=sflag, size = 0x4, offset = 0, fixed_abs, tag = 'sflag constant byte address 0x0 - dummy sync flag']
  %s0 = inlined_call_operand.vmem [shape: f32[2,4,2,128], index: 0, kind: input, shape index: {}]
  %s1 = inlined_call_operand.vmem [shape: f32[2,5,2,128], index: 1, kind: output, shape index: {}]
  %s2 = sld [smem:[#allocation0]]
  $region212: #{append_ratio_ab.1} parent=0
    _
  %s4 = ssub.s32 1, %s2
  %s5 = scalar_select 0, %s4, %s2
  loop: start=0, step=1, limit=2
  $region2: #{append_ratio_ab.1} parent=0 // loop_pre_header
    _
  $region3: #{append_ratio_ab.1} parent=0 // loop_header
    %s7 = sphi 0, %s11
    %p8 = scmp.ge.s32.totalorder %s7, 2
    %s12 = sphi 0, %s20
    %s13 = sphi 0, %s16
  $region4: #{append_ratio_ab.1} parent=0 // loop_header_branch
    %10 = sbr.rel (%p8) target = $region8
  $region5: #{append_ratio_ab.1} parent=0 // loop_body
    %s14 = sadd.s32 1, %s13
    %p15 = scmp.ge.s32.totalorder %s14, 1
    %s16 = scalar_select %p15, 0, %s14
    %s17 = sadd.s32 1, %s12
    %s18 = scalar_select %p15, %s17, %s12
    %p19 = scmp.ge.s32.totalorder %s18, 2
    %s20 = scalar_select %p19, 0, %s18
    %s21 = sadd.s32 %s13, 1
    %p22 = scmp.lt.s32.totalorder %s21, 1
    %s23 = scalar_select %p22, %s21, 1
    %s24 = sand.u32 %s13, 1
    %s25 = smul.u32 %s13, 2
    %p26 = scmp.lt.s32.totalorder %s25, 0
    %s27 = scalar_select %p26, %s25, 0
    %s28 = smul.u32 %s12, 8
    %s29 = sadd.s32 %s27, %s28
    %s30 = scalar_lea.vmem %s0, %s29
    %s31 = smul.u32 %s24, 2
    %s32 = scalar_lea.vmem [#allocation2], %s31
    %s33 = scalar_lea.sflag [#allocation5], %s24
    %p35 = scmp.lt.u32.totalorder 2, 8
    %p36 = pneg %p35
    // Predicated region
    $region9: #{append_ratio_ab.1} parent=5 // pred_check
      _
    $region10: #{append_ratio_ab.1} parent=5 // pred_check_branch
      %38 = sbr.rel (%p35) target = $region12
    $region11: #{append_ratio_ab.1} parent=5 // pred_region
      %s53 = sand.u32 2, 7
      %p54 = scmp.eq.s32.totalorder %s53, 0
      %p55 = pneg %p54
      // Predicated region
      $region24: #{append_ratio_ab.1} parent=11 // pred_check
        _
      $region25: #{append_ratio_ab.1} parent=11 // pred_check_branch
        %57 = sbr.rel (%p54) target = $region27
      $region26: #{append_ratio_ab.1} parent=11 // pred_region
        %s58 = sand.u32 2, 7
        %s59 = ssub.s32 2, %s58
        %s60 = scalar_lea.vmem %s30, %s59
        %s61 = ssub.s32 2, %s58
        %s62 = scalar_lea.vmem %s32, %s61 [#allocation2]
        %s63 = sshllo.u32 0, %s58
        loop: start=0, step=1, limit=1
        $region28: #{append_ratio_ab.1} parent=26 // loop_pre_header
          _
        $region29: #{append_ratio_ab.1} parent=26 // loop_header
          %s65 = sphi 0, %s69
          %p66 = scmp.ge.s32.totalorder %s65, 1
          %s70 = sphi %s60, %s60
          %s71 = sphi %s62, %s62
        $region30: #{append_ratio_ab.1} parent=26 // loop_header_branch
          %68 = sbr.rel (%p66) target = $region34
        $region31: #{append_ratio_ab.1} parent=26 // loop_body
          %v72 = vld [vmem:[%s70] sm:%s63]
          %73 = vst [vmem:[%s71] sm:%s63] %v72
        $region32: #{append_ratio_ab.1} parent=26 // loop_footer
          %s69 = sadd.s32 1, %s65
        $region33: #{append_ratio_ab.1} parent=26 // loop_footer_branch
          %64 = sbr.rel target = $region29
        $region34: #{append_ratio_ab.1} parent=26 // loop_exit
          _
      $region27: #{append_ratio_ab.1} parent=11 // pred_fallthru
        _
    $region12: #{append_ratio_ab.1} parent=5 // pred_fallthru
      _
    // Predicated region
    $region13: #{append_ratio_ab.1} parent=5 // pred_check
      %p39 = pneg %p35
    $region14: #{append_ratio_ab.1} parent=5 // pred_check_branch
      %41 = sbr.rel (%p39) target = $region16
    $region15: #{append_ratio_ab.1} parent=5 // pred_region
      %s42 = sshllo.u32 0, 2
      loop: start=0, step=1, limit=1
      $region17: #{append_ratio_ab.1} parent=15 // loop_pre_header
        _
      $region18: #{append_ratio_ab.1} parent=15 // loop_header
        %s44 = sphi 0, %s48
        %p45 = scmp.ge.s32.totalorder %s44, 1
        %s49 = sphi %s30, %s30
        %s50 = sphi %s32, %s32
      $region19: #{append_ratio_ab.1} parent=15 // loop_header_branch
        %47 = sbr.rel (%p45) target = $region23
      $region20: #{append_ratio_ab.1} parent=15 // loop_body
        %v51 = vld [vmem:[%s49] sm:%s42]
        %52 = vst [vmem:[%s50] sm:%s42] %v51
      $region21: #{append_ratio_ab.1} parent=15 // loop_footer
        %s48 = sadd.s32 1, %s44
      $region22: #{append_ratio_ab.1} parent=15 // loop_footer_branch
        %43 = sbr.rel target = $region18
      $region23: #{append_ratio_ab.1} parent=15 // loop_exit
        _
    $region16: #{append_ratio_ab.1} parent=5 // pred_fallthru
      _
    // Predicated region
    $region35: #{append_ratio_ab.1} parent=5 // pred_check
      _
    $region36: #{append_ratio_ab.1} parent=5 // pred_check_branch
      %76 = sbr.rel (0) target = $region38
    $region37: #{append_ratio_ab.1} parent=5 // pred_region
      %77 = vsyncadd %s33, 32
    $region38: #{append_ratio_ab.1} parent=5 // pred_fallthru
      _
    %s78 = sadd.s32 %s27, 2
    %s79 = sadd.s32 %s78, %s28
    %s80 = scalar_lea.vmem %s0, %s79
    %s81 = scalar_lea.vmem [#allocation3], %s31
    %s82 = sadd.s32 %s24, 2
    %s83 = scalar_lea.sflag [#allocation5], %s82
    %p85 = scmp.lt.u32.totalorder 2, 8
    %p86 = pneg %p85
    // Predicated region
    $region39: #{append_ratio_ab.1} parent=5 // pred_check
      _
    $region40: #{append_ratio_ab.1} parent=5 // pred_check_branch
      %88 = sbr.rel (%p85) target = $region42
    $region41: #{append_ratio_ab.1} parent=5 // pred_region
      %s103 = sand.u32 2, 7
      %p104 = scmp.eq.s32.totalorder %s103, 0
      %p105 = pneg %p104
      // Predicated region
      $region54: #{append_ratio_ab.1} parent=41 // pred_check
        _
      $region55: #{append_ratio_ab.1} parent=41 // pred_check_branch
        %107 = sbr.rel (%p104) target = $region57
      $region56: #{append_ratio_ab.1} parent=41 // pred_region
        %s108 = sand.u32 2, 7
        %s109 = ssub.s32 2, %s108
        %s110 = scalar_lea.vmem %s80, %s109
        %s111 = ssub.s32 2, %s108
        %s112 = scalar_lea.vmem %s81, %s111 [#allocation3]
        %s113 = sshllo.u32 0, %s108
        loop: start=0, step=1, limit=1
        $region58: #{append_ratio_ab.1} parent=56 // loop_pre_header
          _
        $region59: #{append_ratio_ab.1} parent=56 // loop_header
          %s115 = sphi 0, %s119
          %p116 = scmp.ge.s32.totalorder %s115, 1
          %s120 = sphi %s110, %s110
          %s121 = sphi %s112, %s112
        $region60: #{append_ratio_ab.1} parent=56 // loop_header_branch
          %118 = sbr.rel (%p116) target = $region64
        $region61: #{append_ratio_ab.1} parent=56 // loop_body
          %v122 = vld [vmem:[%s120] sm:%s113]
          %123 = vst [vmem:[%s121] sm:%s113] %v122
        $region62: #{append_ratio_ab.1} parent=56 // loop_footer
          %s119 = sadd.s32 1, %s115
        $region63: #{append_ratio_ab.1} parent=56 // loop_footer_branch
          %114 = sbr.rel target = $region59
        $region64: #{append_ratio_ab.1} parent=56 // loop_exit
          _
      $region57: #{append_ratio_ab.1} parent=41 // pred_fallthru
        _
    $region42: #{append_ratio_ab.1} parent=5 // pred_fallthru
      _
    // Predicated region
    $region43: #{append_ratio_ab.1} parent=5 // pred_check
      %p89 = pneg %p85
    $region44: #{append_ratio_ab.1} parent=5 // pred_check_branch
      %91 = sbr.rel (%p89) target = $region46
    $region45: #{append_ratio_ab.1} parent=5 // pred_region
      %s92 = sshllo.u32 0, 2
      loop: start=0, step=1, limit=1
      $region47: #{append_ratio_ab.1} parent=45 // loop_pre_header
        _
      $region48: #{append_ratio_ab.1} parent=45 // loop_header
        %s94 = sphi 0, %s98
        %p95 = scmp.ge.s32.totalorder %s94, 1
        %s99 = sphi %s80, %s80
        %s100 = sphi %s81, %s81
      $region49: #{append_ratio_ab.1} parent=45 // loop_header_branch
        %97 = sbr.rel (%p95) target = $region53
      $region50: #{append_ratio_ab.1} parent=45 // loop_body
        %v101 = vld [vmem:[%s99] sm:%s92]
        %102 = vst [vmem:[%s100] sm:%s92] %v101
      $region51: #{append_ratio_ab.1} parent=45 // loop_footer
        %s98 = sadd.s32 1, %s94
      $region52: #{append_ratio_ab.1} parent=45 // loop_footer_branch
        %93 = sbr.rel target = $region48
      $region53: #{append_ratio_ab.1} parent=45 // loop_exit
        _
    $region46: #{append_ratio_ab.1} parent=5 // pred_fallthru
      _
    // Predicated region
    $region65: #{append_ratio_ab.1} parent=5 // pred_check
      _
    $region66: #{append_ratio_ab.1} parent=5 // pred_check_branch
      %126 = sbr.rel (0) target = $region68
    $region67: #{append_ratio_ab.1} parent=5 // pred_region
      %127 = vsyncadd %s83, 32
    $region68: #{append_ratio_ab.1} parent=5 // pred_fallthru
      _
    %s128 = smul.u32 %s12, 10
    %s129 = sadd.s32 %s27, %s128
    %s130 = scalar_lea.vmem %s1, %s129
    %p132 = scmp.lt.u32.totalorder 8, 8
    %p133 = pneg %p132
    // Predicated region
    $region69: #{append_ratio_ab.1} parent=5 // pred_check
      _
    $region70: #{append_ratio_ab.1} parent=5 // pred_check_branch
      %135 = sbr.rel (%p132) target = $region72
    $region71: #{append_ratio_ab.1} parent=5 // pred_region
      %s150 = sand.u32 8, 7
      %p151 = scmp.eq.s32.totalorder %s150, 0
      // Predicated region
      $region84: #{append_ratio_ab.1} parent=71 // pred_check
        %p152 = pneg %p151
      $region85: #{append_ratio_ab.1} parent=71 // pred_check_branch
        %154 = sbr.rel (%p152) target = $region87
      $region86: #{append_ratio_ab.1} parent=71 // pred_region
        loop: start=0, step=1, limit=1
        $region88: #{append_ratio_ab.1} parent=86 // loop_pre_header
          _
        $region89: #{append_ratio_ab.1} parent=86 // loop_header
          %s156 = sphi 0, %s160
          %p157 = scmp.ge.s32.totalorder %s156, 1
          %s161 = sphi %s30, %s30
          %s162 = sphi %s130, %s130
        $region90: #{append_ratio_ab.1} parent=86 // loop_header_branch
          %159 = sbr.rel (%p157) target = $region94
        $region91: #{append_ratio_ab.1} parent=86 // loop_body
          %v163 = vld [vmem:[%s161] sm:$0xff]
          %164 = vst [vmem:[%s162] sm:$0xff] %v163
        $region92: #{append_ratio_ab.1} parent=86 // loop_footer
          %s160 = sadd.s32 1, %s156
        $region93: #{append_ratio_ab.1} parent=86 // loop_footer_branch
          %155 = sbr.rel target = $region89
        $region94: #{append_ratio_ab.1} parent=86 // loop_exit
          _
      $region87: #{append_ratio_ab.1} parent=71 // pred_fallthru
        _
      %p165 = pneg %p151
      // Predicated region
      $region95: #{append_ratio_ab.1} parent=71 // pred_check
        _
      $region96: #{append_ratio_ab.1} parent=71 // pred_check_branch
        %167 = sbr.rel (%p151) target = $region98
      $region97: #{append_ratio_ab.1} parent=71 // pred_region
        %s168 = sand.u32 8, 7
      $region98: #{append_ratio_ab.1} parent=71 // pred_fallthru
        _
    $region72: #{append_ratio_ab.1} parent=5 // pred_fallthru
      _
    // Predicated region
    $region73: #{append_ratio_ab.1} parent=5 // pred_check
      %p136 = pneg %p132
    $region74: #{append_ratio_ab.1} parent=5 // pred_check_branch
      %138 = sbr.rel (%p136) target = $region76
    $region75: #{append_ratio_ab.1} parent=5 // pred_region
      %s139 = sshllo.u32 0, 8
      loop: start=0, step=1, limit=1
      $region77: #{append_ratio_ab.1} parent=75 // loop_pre_header
        _
      $region78: #{append_ratio_ab.1} parent=75 // loop_header
        %s141 = sphi 0, %s145
        %p142 = scmp.ge.s32.totalorder %s141, 1
        %s146 = sphi %s30, %s30
        %s147 = sphi %s130, %s130
      $region79: #{append_ratio_ab.1} parent=75 // loop_header_branch
        %144 = sbr.rel (%p142) target = $region83
      $region80: #{append_ratio_ab.1} parent=75 // loop_body
        %v148 = vld [vmem:[%s146] sm:%s139]
        %149 = vst [vmem:[%s147] sm:%s139] %v148
      $region81: #{append_ratio_ab.1} parent=75 // loop_footer
        %s145 = sadd.s32 1, %s141
      $region82: #{append_ratio_ab.1} parent=75 // loop_footer_branch
        %140 = sbr.rel target = $region78
      $region83: #{append_ratio_ab.1} parent=75 // loop_exit
        _
    $region76: #{append_ratio_ab.1} parent=5 // pred_fallthru
      _
    // Predicated region
    $region99: #{append_ratio_ab.1} parent=5 // pred_check
      _
    $region100: #{append_ratio_ab.1} parent=5 // pred_check_branch
      %171 = sbr.rel (0) target = $region102
    $region101: #{append_ratio_ab.1} parent=5 // pred_region
      %172 = vsyncadd [#allocation6], 128
    $region102: #{append_ratio_ab.1} parent=5 // pred_fallthru
      _
    // While loop
    $region103: #{append_ratio_ab.1} parent=5 // loop_pre_header
      _
    $region104: #{append_ratio_ab.1} parent=5 // loop_header
      %s174 = sphi %s13, %s176
      %p175 = scmp.ge.s32.totalorder %s174, %s23
    $region105: #{append_ratio_ab.1} parent=5 // loop_header_branch
      %178 = sbr.rel (%p175) target = $region109
    $region106: #{append_ratio_ab.1} parent=5 // loop_body
      %s179 = sand.u32 %s174, 1
      %s180 = smul.u32 %s174, 2
      %p181 = scmp.lt.s32.totalorder %s180, 0
      %s182 = scalar_select %p181, %s180, 0
      %s183 = smul.u32 %s179, 2
      %s184 = scalar_lea.vmem [#allocation2], %s183
      %s185 = scalar_lea.sflag [#allocation5], %s179
      %s186 = smul.u32 2, 1
      %s187 = sshll.u32 %s186, 4
      %188 = dma.done %s185, %s187
      %s189 = scalar_lea.vmem [#allocation3], %s183
      %s190 = sadd.s32 %s179, 2
      %s191 = scalar_lea.sflag [#allocation5], %s190
      %s192 = sshll.u32 %s186, 4
      %193 = dma.done %s191, %s192
      %s194 = sadd.s32 %s174, 1
      %p195 = scmp.lt.s32.totalorder %s194, %s23
      // Predicated region
      $region110: #{append_ratio_ab.1} parent=106 // pred_check
        %p196 = pneg %p195
      $region111: #{append_ratio_ab.1} parent=106 // pred_check_branch
        %198 = sbr.rel (%p196) target = $region113
      $region112: #{append_ratio_ab.1} parent=106 // pred_region
        %s199 = ssub.s32 1, %s179
        %s200 = smul.u32 %s194, 2
        %p201 = scmp.lt.s32.totalorder %s200, 0
        %s202 = scalar_select %p201, %s200, 0
        %s203 = sadd.s32 %s202, %s28
        %s204 = scalar_lea.vmem %s0, %s203
        %s205 = smul.u32 %s199, 2
        %s206 = scalar_lea.vmem [#allocation2], %s205
        %s207 = scalar_lea.sflag [#allocation5], %s199
        %p209 = scmp.lt.u32.totalorder 2, 8
        %p210 = pneg %p209
        // Predicated region
        $region114: #{append_ratio_ab.1} parent=112 // pred_check
          _
        $region115: #{append_ratio_ab.1} parent=112 // pred_check_branch
          %212 = sbr.rel (%p209) target = $region117
        $region116: #{append_ratio_ab.1} parent=112 // pred_region
          %s227 = sand.u32 2, 7
          %p228 = scmp.eq.s32.totalorder %s227, 0
          %p229 = pneg %p228
          // Predicated region
          $region129: #{append_ratio_ab.1} parent=116 // pred_check
            _
          $region130: #{append_ratio_ab.1} parent=116 // pred_check_branch
            %231 = sbr.rel (%p228) target = $region132
          $region131: #{append_ratio_ab.1} parent=116 // pred_region
            %s232 = sand.u32 2, 7
            %s233 = ssub.s32 2, %s232
            %s234 = scalar_lea.vmem %s204, %s233
            %s235 = ssub.s32 2, %s232
            %s236 = scalar_lea.vmem %s206, %s235 [#allocation2]
            %s237 = sshllo.u32 0, %s232
            loop: start=0, step=1, limit=1
            $region133: #{append_ratio_ab.1} parent=131 // loop_pre_header
              _
            $region134: #{append_ratio_ab.1} parent=131 // loop_header
              %s239 = sphi 0, %s243
              %p240 = scmp.ge.s32.totalorder %s239, 1
              %s244 = sphi %s234, %s234
              %s245 = sphi %s236, %s236
            $region135: #{append_ratio_ab.1} parent=131 // loop_header_branch
              %242 = sbr.rel (%p240) target = $region139
            $region136: #{append_ratio_ab.1} parent=131 // loop_body
              %v246 = vld [vmem:[%s244] sm:%s237]
              %247 = vst [vmem:[%s245] sm:%s237] %v246
            $region137: #{append_ratio_ab.1} parent=131 // loop_footer
              %s243 = sadd.s32 1, %s239
            $region138: #{append_ratio_ab.1} parent=131 // loop_footer_branch
              %238 = sbr.rel target = $region134
            $region139: #{append_ratio_ab.1} parent=131 // loop_exit
              _
          $region132: #{append_ratio_ab.1} parent=116 // pred_fallthru
            _
        $region117: #{append_ratio_ab.1} parent=112 // pred_fallthru
          _
        // Predicated region
        $region118: #{append_ratio_ab.1} parent=112 // pred_check
          %p213 = pneg %p209
        $region119: #{append_ratio_ab.1} parent=112 // pred_check_branch
          %215 = sbr.rel (%p213) target = $region121
        $region120: #{append_ratio_ab.1} parent=112 // pred_region
          %s216 = sshllo.u32 0, 2
          loop: start=0, step=1, limit=1
          $region122: #{append_ratio_ab.1} parent=120 // loop_pre_header
            _
          $region123: #{append_ratio_ab.1} parent=120 // loop_header
            %s218 = sphi 0, %s222
            %p219 = scmp.ge.s32.totalorder %s218, 1
            %s223 = sphi %s204, %s204
            %s224 = sphi %s206, %s206
          $region124: #{append_ratio_ab.1} parent=120 // loop_header_branch
            %221 = sbr.rel (%p219) target = $region128
          $region125: #{append_ratio_ab.1} parent=120 // loop_body
            %v225 = vld [vmem:[%s223] sm:%s216]
            %226 = vst [vmem:[%s224] sm:%s216] %v225
          $region126: #{append_ratio_ab.1} parent=120 // loop_footer
            %s222 = sadd.s32 1, %s218
          $region127: #{append_ratio_ab.1} parent=120 // loop_footer_branch
            %217 = sbr.rel target = $region123
          $region128: #{append_ratio_ab.1} parent=120 // loop_exit
            _
        $region121: #{append_ratio_ab.1} parent=112 // pred_fallthru
          _
        // Predicated region
        $region140: #{append_ratio_ab.1} parent=112 // pred_check
          _
        $region141: #{append_ratio_ab.1} parent=112 // pred_check_branch
          %250 = sbr.rel (0) target = $region143
        $region142: #{append_ratio_ab.1} parent=112 // pred_region
          %251 = vsyncadd %s207, 32
        $region143: #{append_ratio_ab.1} parent=112 // pred_fallthru
          _
        %s252 = sadd.s32 %s202, 2
        %s253 = sadd.s32 %s252, %s28
        %s254 = scalar_lea.vmem %s0, %s253
        %s255 = scalar_lea.vmem [#allocation3], %s205
        %s256 = sadd.s32 %s199, 2
        %s257 = scalar_lea.sflag [#allocation5], %s256
        %p259 = scmp.lt.u32.totalorder 2, 8
        %p260 = pneg %p259
        // Predicated region
        $region144: #{append_ratio_ab.1} parent=112 // pred_check
          _
        $region145: #{append_ratio_ab.1} parent=112 // pred_check_branch
          %262 = sbr.rel (%p259) target = $region147
        $region146: #{append_ratio_ab.1} parent=112 // pred_region
          %s277 = sand.u32 2, 7
          %p278 = scmp.eq.s32.totalorder %s277, 0
          %p279 = pneg %p278
          // Predicated region
          $region159: #{append_ratio_ab.1} parent=146 // pred_check
            _
          $region160: #{append_ratio_ab.1} parent=146 // pred_check_branch
            %281 = sbr.rel (%p278) target = $region162
          $region161: #{append_ratio_ab.1} parent=146 // pred_region
            %s282 = sand.u32 2, 7
            %s283 = ssub.s32 2, %s282
            %s284 = scalar_lea.vmem %s254, %s283
            %s285 = ssub.s32 2, %s282
            %s286 = scalar_lea.vmem %s255, %s285 [#allocation3]
            %s287 = sshllo.u32 0, %s282
            loop: start=0, step=1, limit=1
            $region163: #{append_ratio_ab.1} parent=161 // loop_pre_header
              _
            $region164: #{append_ratio_ab.1} parent=161 // loop_header
              %s289 = sphi 0, %s293
              %p290 = scmp.ge.s32.totalorder %s289, 1
              %s294 = sphi %s284, %s284
              %s295 = sphi %s286, %s286
            $region165: #{append_ratio_ab.1} parent=161 // loop_header_branch
              %292 = sbr.rel (%p290) target = $region169
            $region166: #{append_ratio_ab.1} parent=161 // loop_body
              %v296 = vld [vmem:[%s294] sm:%s287]
              %297 = vst [vmem:[%s295] sm:%s287] %v296
            $region167: #{append_ratio_ab.1} parent=161 // loop_footer
              %s293 = sadd.s32 1, %s289
            $region168: #{append_ratio_ab.1} parent=161 // loop_footer_branch
              %288 = sbr.rel target = $region164
            $region169: #{append_ratio_ab.1} parent=161 // loop_exit
              _
          $region162: #{append_ratio_ab.1} parent=146 // pred_fallthru
            _
        $region147: #{append_ratio_ab.1} parent=112 // pred_fallthru
          _
        // Predicated region
        $region148: #{append_ratio_ab.1} parent=112 // pred_check
          %p263 = pneg %p259
        $region149: #{append_ratio_ab.1} parent=112 // pred_check_branch
          %265 = sbr.rel (%p263) target = $region151
        $region150: #{append_ratio_ab.1} parent=112 // pred_region
          %s266 = sshllo.u32 0, 2
          loop: start=0, step=1, limit=1
          $region152: #{append_ratio_ab.1} parent=150 // loop_pre_header
            _
          $region153: #{append_ratio_ab.1} parent=150 // loop_header
            %s268 = sphi 0, %s272
            %p269 = scmp.ge.s32.totalorder %s268, 1
            %s273 = sphi %s254, %s254
            %s274 = sphi %s255, %s255
          $region154: #{append_ratio_ab.1} parent=150 // loop_header_branch
            %271 = sbr.rel (%p269) target = $region158
          $region155: #{append_ratio_ab.1} parent=150 // loop_body
            %v275 = vld [vmem:[%s273] sm:%s266]
            %276 = vst [vmem:[%s274] sm:%s266] %v275
          $region156: #{append_ratio_ab.1} parent=150 // loop_footer
            %s272 = sadd.s32 1, %s268
          $region157: #{append_ratio_ab.1} parent=150 // loop_footer_branch
            %267 = sbr.rel target = $region153
          $region158: #{append_ratio_ab.1} parent=150 // loop_exit
            _
        $region151: #{append_ratio_ab.1} parent=112 // pred_fallthru
          _
        // Predicated region
        $region170: #{append_ratio_ab.1} parent=112 // pred_check
          _
        $region171: #{append_ratio_ab.1} parent=112 // pred_check_branch
          %300 = sbr.rel (0) target = $region173
        $region172: #{append_ratio_ab.1} parent=112 // pred_region
          %301 = vsyncadd %s257, 32
        $region173: #{append_ratio_ab.1} parent=112 // pred_fallthru
          _
      $region113: #{append_ratio_ab.1} parent=106 // pred_fallthru
        _
      %s302 = ssub.s32 %s174, %s13
      %p303 = scmp.ge.s32.totalorder %s302, 2
      // Predicated region
      $region174: #{append_ratio_ab.1} parent=106 // pred_check
        %p304 = pneg %p303
      $region175: #{append_ratio_ab.1} parent=106 // pred_check_branch
        %306 = sbr.rel (%p304) target = $region177
      $region176: #{append_ratio_ab.1} parent=106 // pred_region
        %s307 = sadd.s32 %s179, 4
        %s308 = scalar_lea.sflag [#allocation5], %s307
        %s309 = sshll.u32 %s186, 4
        %310 = dma.done %s308, %s309
      $region177: #{append_ratio_ab.1} parent=106 // pred_fallthru
        _
      %v311 = vld [vmem:[%s184] sm:$0x3]
      %v312 = vld [vmem:[%s189] sm:$0x3]
      %v313 = vadd.f32 %v312, 1e-10
      %v314 = vrcp.pop %v313
      %v315 = vmul.f32 %v311, %v314
      %s316 = scalar_lea.vmem [#allocation4], %s183
      %317 = vst [vmem:[%s316] sm:$0x3] %v315
      %s318 = sadd.s32 %s182, 8
      %s319 = sadd.s32 %s318, %s128
      %s320 = scalar_lea.vmem %s1, %s319
      %s321 = sadd.s32 %s179, 4
      %s322 = scalar_lea.sflag [#allocation5], %s321
      %p324 = scmp.lt.u32.totalorder 2, 8
      %p325 = pneg %p324
      // Predicated region
      $region178: #{append_ratio_ab.1} parent=106 // pred_check
        _
      $region179: #{append_ratio_ab.1} parent=106 // pred_check_branch
        %327 = sbr.rel (%p324) target = $region181
      $region180: #{append_ratio_ab.1} parent=106 // pred_region
        %s342 = sand.u32 2, 7
        %p343 = scmp.eq.s32.totalorder %s342, 0
        %p344 = pneg %p343
        // Predicated region
        $region193: #{append_ratio_ab.1} parent=180 // pred_check
          _
        $region194: #{append_ratio_ab.1} parent=180 // pred_check_branch
          %346 = sbr.rel (%p343) target = $region196
        $region195: #{append_ratio_ab.1} parent=180 // pred_region
          %s347 = sand.u32 2, 7
          %s348 = ssub.s32 2, %s347
          %s349 = scalar_lea.vmem %s316, %s348 [#allocation4]
          %s350 = ssub.s32 2, %s347
          %s351 = scalar_lea.vmem %s320, %s350
          %s352 = sshllo.u32 0, %s347
          loop: start=0, step=1, limit=1
          $region197: #{append_ratio_ab.1} parent=195 // loop_pre_header
            _
          $region198: #{append_ratio_ab.1} parent=195 // loop_header
            %s354 = sphi 0, %s358
            %p355 = scmp.ge.s32.totalorder %s354, 1
            %s359 = sphi %s349, %s349
            %s360 = sphi %s351, %s351
          $region199: #{append_ratio_ab.1} parent=195 // loop_header_branch
            %357 = sbr.rel (%p355) target = $region203
          $region200: #{append_ratio_ab.1} parent=195 // loop_body
            %v361 = vld [vmem:[%s359] sm:%s352]
            %362 = vst [vmem:[%s360] sm:%s352] %v361
          $region201: #{append_ratio_ab.1} parent=195 // loop_footer
            %s358 = sadd.s32 1, %s354
          $region202: #{append_ratio_ab.1} parent=195 // loop_footer_branch
            %353 = sbr.rel target = $region198
          $region203: #{append_ratio_ab.1} parent=195 // loop_exit
            _
        $region196: #{append_ratio_ab.1} parent=180 // pred_fallthru
          _
      $region181: #{append_ratio_ab.1} parent=106 // pred_fallthru
        _
      // Predicated region
      $region182: #{append_ratio_ab.1} parent=106 // pred_check
        %p328 = pneg %p324
      $region183: #{append_ratio_ab.1} parent=106 // pred_check_branch
        %330 = sbr.rel (%p328) target = $region185
      $region184: #{append_ratio_ab.1} parent=106 // pred_region
        %s331 = sshllo.u32 0, 2
        loop: start=0, step=1, limit=1
        $region186: #{append_ratio_ab.1} parent=184 // loop_pre_header
          _
        $region187: #{append_ratio_ab.1} parent=184 // loop_header
          %s333 = sphi 0, %s337
          %p334 = scmp.ge.s32.totalorder %s333, 1
          %s338 = sphi %s316, %s316
          %s339 = sphi %s320, %s320
        $region188: #{append_ratio_ab.1} parent=184 // loop_header_branch
          %336 = sbr.rel (%p334) target = $region192
        $region189: #{append_ratio_ab.1} parent=184 // loop_body
          %v340 = vld [vmem:[%s338] sm:%s331]
          %341 = vst [vmem:[%s339] sm:%s331] %v340
        $region190: #{append_ratio_ab.1} parent=184 // loop_footer
          %s337 = sadd.s32 1, %s333
        $region191: #{append_ratio_ab.1} parent=184 // loop_footer_branch
          %332 = sbr.rel target = $region187
        $region192: #{append_ratio_ab.1} parent=184 // loop_exit
          _
      $region185: #{append_ratio_ab.1} parent=106 // pred_fallthru
        _
      // Predicated region
      $region204: #{append_ratio_ab.1} parent=106 // pred_check
        _
      $region205: #{append_ratio_ab.1} parent=106 // pred_check_branch
        %365 = sbr.rel (0) target = $region207
      $region206: #{append_ratio_ab.1} parent=106 // pred_region
        %366 = vsyncadd %s322, 32
      $region207: #{append_ratio_ab.1} parent=106 // pred_fallthru
        _
    $region107: #{append_ratio_ab.1} parent=5 // loop_footer
      %s176 = sadd.s32 %s174, 1
    $region108: #{append_ratio_ab.1} parent=5 // loop_footer_branch
      %173 = sbr.rel target = $region104
    $region109: #{append_ratio_ab.1} parent=5 // loop_exit
      _
    %s367 = ssub.s32 %s23, 1
    %s368 = sand.u32 %s367, 1
    %s369 = sadd.s32 %s368, 4
    %s370 = scalar_lea.sflag [#allocation5], %s369
    %s371 = smul.u32 2, 1
    %s372 = sshll.u32 %s371, 4
    %373 = dma.done %s370, %s372
    %s374 = ssub.s32 %s23, %s13
    %p375 = scmp.ge.s32.totalorder %s374, 2
    // Predicated region
    $region208: #{append_ratio_ab.1} parent=5 // pred_check
      %p376 = pneg %p375
    $region209: #{append_ratio_ab.1} parent=5 // pred_check_branch
      %378 = sbr.rel (%p376) target = $region211
    $region210: #{append_ratio_ab.1} parent=5 // pred_region
      %s379 = ssub.s32 %s23, 2
      %s380 = sand.u32 %s379, 1
      %s381 = sadd.s32 %s380, 4
      %s382 = scalar_lea.sflag [#allocation5], %s381
      %s383 = sshll.u32 %s371, 4
      %384 = dma.done %s382, %s383
    $region211: #{append_ratio_ab.1} parent=5 // pred_fallthru
      _
    %s385 = smul.u32 4, 2
    %s386 = smul.u32 %s385, 1
    %s387 = sshll.u32 %s386, 4
    %388 = dma.done [#allocation6], %s387
  $region6: #{append_ratio_ab.1} parent=0 // loop_footer
    %s11 = sadd.s32 1, %s7
  $region7: #{append_ratio_ab.1} parent=0 // loop_footer_branch
    %6 = sbr.rel target = $region3
  $region8: #{append_ratio_ab.1} parent=0 // loop_exit
    _
  %389 = vsyncmov [#allocation5]
  %s390 = vpop.sfrf %389
  %p391 = scmp.eq.s32.totalorder %s390, 0
  %p392 = pneg %p391
  %394 = shalt.err (%p392)
  %s395 = scalar_lea.sflag [#allocation5], 1
  %396 = vsyncmov %s395
  %s397 = vpop.sfrf %396
  %p398 = scmp.eq.s32.totalorder %s397, 0
  %p399 = pneg %p398
  %401 = shalt.err (%p399)
  %s402 = scalar_lea.sflag [#allocation5], 2
  %403 = vsyncmov %s402
  %s404 = vpop.sfrf %403
  %p405 = scmp.eq.s32.totalorder %s404, 0
  %p406 = pneg %p405
  %408 = shalt.err (%p406)
  %s409 = scalar_lea.sflag [#allocation5], 3
  %410 = vsyncmov %s409
  %s411 = vpop.sfrf %410
  %p412 = scmp.eq.s32.totalorder %s411, 0
  %p413 = pneg %p412
  %415 = shalt.err (%p413)
  %s416 = scalar_lea.sflag [#allocation5], 4
  %417 = vsyncmov %s416
  %s418 = vpop.sfrf %417
  %p419 = scmp.eq.s32.totalorder %s418, 0
  %p420 = pneg %p419
  %422 = shalt.err (%p420)
  %s423 = scalar_lea.sflag [#allocation5], 5
  %424 = vsyncmov %s423
  %s425 = vpop.sfrf %424
  %p426 = scmp.eq.s32.totalorder %s425, 0
  %p427 = pneg %p426
  %429 = shalt.err (%p427)
  %430 = vsyncmov [#allocation6]
  %s431 = vpop.sfrf %430
  %p432 = scmp.eq.s32.totalorder %s431, 0
  %p433 = pneg %p432
  %435 = shalt.err (%p433)

</llo_original>
